<compile_context>
chip_gen: v6e
topology: v6e:2x2x1
jax: 0.10.0
libtpu: 0.0.40
codegen_flags: <defaults>
</compile_context>

<pallas_src>
import functools

import jax
import jax.numpy as jnp
from jax.experimental import pallas as pl
from jax.experimental.pallas import tpu as pltpu

LANE = 128
NEG_INF = -1e30  # softmax mask for padded output columns


def _round_up(n, m):
    return ((n + m - 1) // m) * m


def _net_kernel(x_ref, w1_ref, b1_ref, w2_ref, b2_ref, out_ref):
    # fc1: (tb, I) @ (I, Hp) in bf16 on the MXU, f32 accumulation; tanh on EUP.
    xb = x_ref[...].astype(jnp.bfloat16)
    h = jnp.dot(xb, w1_ref[...], preferred_element_type=jnp.float32)
    h = jnp.tanh(h + b1_ref[...])
    # fc2: (tb, Hp) @ (Hp, Op); padded bias entries are -1e30 so padded logits
    # drop out of the softmax (exp underflows to exactly 0 in f32).
    logits = jnp.dot(h.astype(jnp.bfloat16), w2_ref[...],
                     preferred_element_type=jnp.float32)
    logits = logits + b2_ref[...]
    # Numerically stable log_softmax along the last (lane) axis, in f32.
    m = jnp.max(logits, axis=-1, keepdims=True)
    shifted = logits - m
    lse = jnp.log(jnp.sum(jnp.exp(shifted), axis=-1, keepdims=True))
    out = shifted - lse
    # Store only the real output columns (masked lane stores; avoids an 8x
    # padded HBM write plus a follow-up slice op in the wrapper).
    out_ref[...] = out[:, : out_ref.shape[-1]].astype(out_ref.dtype)


def prepare_params(w1_t, b1, w2_t, b2):
    """Pad/cast parameters once (outside the hot loop).

    w1_t: (I, H)  b1: (H,)  w2_t: (H, O)  b2: (O,)   (weights pre-transposed,
    equivalent to PyTorch's x @ W.T with W of shape (out, in)).

    Weights -> bf16, lane-padded to 128 (zero pad rows/cols: exact-zero
    contribution).  Biases stay f32; padded fc2 bias entries are -1e30 so the
    padded logits are masked out of the softmax.
    """
    I, H = w1_t.shape
    O = w2_t.shape[1]
    Hp = _round_up(max(H, LANE), LANE)
    Op = _round_up(max(O, LANE), LANE)

    w1_p = jnp.zeros((I, Hp), jnp.bfloat16).at[:, :H].set(w1_t.astype(jnp.bfloat16))
    b1_p = jnp.zeros((1, Hp), jnp.float32).at[0, :H].set(b1.astype(jnp.float32))
    w2_p = jnp.zeros((Hp, Op), jnp.bfloat16).at[:H, :O].set(w2_t.astype(jnp.bfloat16))
    b2_p = jnp.full((1, Op), NEG_INF, jnp.float32).at[0, :O].set(b2.astype(jnp.float32))
    return w1_p, b1_p, w2_p, b2_p, O


@functools.partial(jax.jit, static_argnames=("out_size", "block_b"))
def net_forward(x, w1_p, b1_p, w2_p, b2_p, *, out_size, block_b=512):
    """x: (B, I) f32; padded params from prepare_params. Returns (B, out_size) f32."""
    B, I = x.shape
    Hp = w1_p.shape[1]
    Op = w2_p.shape[1]

    # Batch tile: target a 2-step grid (amortizes per-step overhead everywhere
    # and gives v7x's 2 TensorCores one "parallel" step each).  Multiple of 16
    # rows (bf16 sublane tile).  No explicit batch-pad copy: pl.cdiv + Pallas
    # boundary-block masking handles a ragged last tile (rows are independent).
    # NOTE(v5e/v7x): if block_b is raised into the thousands or H/O grow, add
    # vmem_limit_bytes to CompilerParams (v5e default scoped VMEM is 16 MiB,
    # v7x has 64 MiB physical per TC) -- not needed at these shapes.
    tb = max(16, min(block_b, _round_up(pl.cdiv(B, 2), 16)))
    grid = (pl.cdiv(B, tb),)

    flops = 2 * B * (I * Hp + Hp * Op)
    transcendentals = B * (Hp + Op) + B  # tanh + exp + one log per row
    bytes_accessed = (B * I * x.dtype.itemsize          # x read
                      + (I * Hp + Hp * Op) * 2          # bf16 weights
                      + (Hp + Op) * 4                   # f32 biases
                      + B * out_size * 4)               # f32 output write

    return pl.pallas_call(
        _net_kernel,
        out_shape=jax.ShapeDtypeStruct((B, out_size), jnp.float32),
        grid=grid,
        in_specs=[
            pl.BlockSpec((tb, I), lambda i: (i, 0)),     # x row tile
            pl.BlockSpec((I, Hp), lambda i: (0, 0)),     # w1 (resident, bf16)
            pl.BlockSpec((1, Hp), lambda i: (0, 0)),     # b1 (resident, f32)
            pl.BlockSpec((Hp, Op), lambda i: (0, 0)),    # w2 (resident, bf16)
            pl.BlockSpec((1, Op), lambda i: (0, 0)),     # b2 (resident, f32)
        ],
        out_specs=pl.BlockSpec((tb, out_size), lambda i: (i, 0)),
        compiler_params=pltpu.CompilerParams(
            dimension_semantics=("parallel",),           # shard batch across TCs (v7x)
        ),
        cost_estimate=pl.CostEstimate(
            flops=flops,
            transcendentals=transcendentals,
            bytes_accessed=bytes_accessed,
        ),
    )(x, w1_p, b1_p, w2_p, b2_p)


def reference_forward(x, w1_t, b1, w2_t, b2):
    """Pure-f32 reference (matches the PyTorch module semantics)."""
    h = jnp.tanh(x @ w1_t + b1)
    logits = h @ w2_t + b2
    return jax.nn.log_softmax(logits, axis=1)


def reference_forward_bf16(x, w1_t_bf16, b1, w2_t_bf16, b2):
    """Reference using the same bf16 casts / f32 accumulation as the kernel."""
    h = jnp.dot(x.astype(jnp.bfloat16), w1_t_bf16,
                preferred_element_type=jnp.float32) + b1
    h = jnp.tanh(h)
    logits = jnp.dot(h.astype(jnp.bfloat16), w2_t_bf16,
                     preferred_element_type=jnp.float32) + b2
    return jax.nn.log_softmax(logits, axis=1)


if __name__ == "__main__":
    # Shapes implied by the module: x is (batch, input_size).
    batch, input_size, hidden_size, output_size = 512, 32, 64, 16

    key = jax.random.PRNGKey(0)
    kx, kw1, kb1, kw2, kb2 = jax.random.split(key, 5)

    x = jax.random.normal(kx, (batch, input_size), dtype=jnp.float32)

    # PyTorch-Linear-style init: U(-1/sqrt(fan_in), 1/sqrt(fan_in)),
    # weights stored pre-transposed as (in, out).
    bound1 = 1.0 / (input_size ** 0.5)
    w1_t = jax.random.uniform(kw1, (input_size, hidden_size), jnp.float32,
                              minval=-bound1, maxval=bound1)
    b1 = jax.random.uniform(kb1, (hidden_size,), jnp.float32,
                            minval=-bound1, maxval=bound1)

    bound2 = 1.0 / (hidden_size ** 0.5)
    w2_t = jax.random.uniform(kw2, (hidden_size, output_size), jnp.float32,
                              minval=-bound2, maxval=bound2)
    b2 = jax.random.uniform(kb2, (output_size,), jnp.float32,
                            minval=-bound2, maxval=bound2)

    # Pad/cast params once; run the batched kernel: tb=256 -> grid=(2,).
    w1_p, b1_p, w2_p, b2_p, o_size = prepare_params(w1_t, b1, w2_t, b2)
    out = net_forward(x, w1_p, b1_p, w2_p, b2_p, out_size=o_size)
    out = jax.block_until_ready(out)

    assert out.shape == (batch, output_size)
    assert bool(jnp.all(jnp.isfinite(out)))

    # Tight check against a reference that uses the same bf16 weight/activation
    # casts (isolates kernel correctness from quantization).
    ref_bf16 = reference_forward_bf16(x, w1_t.astype(jnp.bfloat16), b1,
                                      w2_t.astype(jnp.bfloat16), b2)
    assert jnp.allclose(out, ref_bf16, atol=5e-3, rtol=0.0)

    # Loose check against the full-f32 reference (bf16 rounding only).
    ref_f32 = reference_forward(x, w1_t, b1, w2_t, b2)
    assert jnp.allclose(out, ref_f32, atol=5e-2, rtol=0.0)

    print("KERNEL_OK")
</pallas_src>

<mosaic_0001>
module attributes {stable_mosaic.version = 11 : i64} {
  func.func @_net_kernel(%arg0: i32, %arg1: memref<256x32xf32, #tpu.memory_space<vmem>>, %arg2: memref<32x128xbf16, #tpu.memory_space<vmem>>, %arg3: memref<1x128xf32, #tpu.memory_space<vmem>>, %arg4: memref<128x128xbf16, #tpu.memory_space<vmem>>, %arg5: memref<1x128xf32, #tpu.memory_space<vmem>>, %arg6: memref<256x16xf32, #tpu.memory_space<vmem>>) attributes {dimension_semantics = [#tpu.dimension_semantics<parallel>], iteration_bounds = array<i64: 2>, scalar_prefetch = 0 : i64, scratch_operands = 0 : i64, tpu.core_type = #tpu.core_type<tc>, window_params = [{transform_indices = @transform_0, window_bounds = array<i64: 256, 32>}, {pipeline_mode = #tpu.pipeline_mode<synchronous>, transform_indices = @transform_1, window_bounds = array<i64: 32, 128>}, {pipeline_mode = #tpu.pipeline_mode<synchronous>, transform_indices = @transform_2, window_bounds = array<i64: 1, 128>}, {pipeline_mode = #tpu.pipeline_mode<synchronous>, transform_indices = @transform_3, window_bounds = array<i64: 128, 128>}, {pipeline_mode = #tpu.pipeline_mode<synchronous>, transform_indices = @transform_4, window_bounds = array<i64: 1, 128>}, {transform_indices = @transform_5, window_bounds = array<i64: 256, 16>}]} {
    %c0 = arith.constant 0 : index
    %c0_0 = arith.constant 0 : index
    %0 = vector.load %arg1[%c0, %c0_0] : memref<256x32xf32, #tpu.memory_space<vmem>>, vector<256x32xf32>
    %1 = arith.truncf %0 : vector<256x32xf32> to vector<256x32xbf16>
    %c0_1 = arith.constant 0 : index
    %c0_2 = arith.constant 0 : index
    %2 = vector.load %arg2[%c0_1, %c0_2] : memref<32x128xbf16, #tpu.memory_space<vmem>>, vector<32x128xbf16>
    %cst = arith.constant dense<0.000000e+00> : vector<256x128xf32>
    %3 = tpu.matmul %1, %2, %cst {dimension_numbers = #tpu.dot_dimension_numbers<[1], [0], [0], [1], [0, 0, 1, 1], [], []>} : vector<256x32xbf16>, vector<32x128xbf16>, vector<256x128xf32> -> vector<256x128xf32>
    %c0_3 = arith.constant 0 : index
    %c0_4 = arith.constant 0 : index
    %4 = vector.load %arg3[%c0_3, %c0_4] : memref<1x128xf32, #tpu.memory_space<vmem>>, vector<1x128xf32>
    %5 = vector.broadcast %4 : vector<1x128xf32> to vector<256x128xf32>
    %6 = arith.addf %3, %5 : vector<256x128xf32>
    %7 = math.tanh %6 : vector<256x128xf32>
    %8 = arith.truncf %7 : vector<256x128xf32> to vector<256x128xbf16>
    %c0_5 = arith.constant 0 : index
    %c0_6 = arith.constant 0 : index
    %9 = vector.load %arg4[%c0_5, %c0_6] : memref<128x128xbf16, #tpu.memory_space<vmem>>, vector<128x128xbf16>
    %cst_7 = arith.constant dense<0.000000e+00> : vector<256x128xf32>
    %10 = tpu.matmul %8, %9, %cst_7 {dimension_numbers = #tpu.dot_dimension_numbers<[1], [0], [0], [1], [0, 0, 1, 1], [], []>} : vector<256x128xbf16>, vector<128x128xbf16>, vector<256x128xf32> -> vector<256x128xf32>
    %c0_8 = arith.constant 0 : index
    %c0_9 = arith.constant 0 : index
    %11 = vector.load %arg5[%c0_8, %c0_9] : memref<1x128xf32, #tpu.memory_space<vmem>>, vector<1x128xf32>
    %12 = vector.broadcast %11 : vector<1x128xf32> to vector<256x128xf32>
    %13 = arith.addf %10, %12 : vector<256x128xf32>
    %cst_10 = arith.constant dense<0xFF800000> : vector<256xf32>
    %14 = vector.multi_reduction <maximumf>, %13, %cst_10 [1] : vector<256x128xf32> to vector<256xf32>
    %15 = vector.shape_cast %14 : vector<256xf32> to vector<256x1xf32>
    %16 = vector.broadcast %15 : vector<256x1xf32> to vector<256x128xf32>
    %17 = arith.subf %13, %16 : vector<256x128xf32>
    %18 = math.exp %17 : vector<256x128xf32>
    %cst_11 = arith.constant dense<0.000000e+00> : vector<256xf32>
    %19 = vector.multi_reduction <add>, %18, %cst_11 [1] : vector<256x128xf32> to vector<256xf32>
    %20 = vector.shape_cast %19 : vector<256xf32> to vector<256x1xf32>
    %21 = math.log %20 : vector<256x1xf32>
    %22 = vector.broadcast %21 : vector<256x1xf32> to vector<256x128xf32>
    %23 = arith.subf %17, %22 : vector<256x128xf32>
    %24 = vector.extract_strided_slice %23 {offsets = [0, 0], sizes = [256, 16], strides = [1, 1]} : vector<256x128xf32> to vector<256x16xf32>
    %c0_12 = arith.constant 0 : index
    %c0_13 = arith.constant 0 : index
    %25 = vector.load %arg6[%c0_12, %c0_13] : memref<256x16xf32, #tpu.memory_space<vmem>>, vector<256x16xf32>
    tpu.vector_store %arg6[%c0_12, %c0_13], %24 {strides = array<i32>} : memref<256x16xf32, #tpu.memory_space<vmem>>, vector<256x16xf32>,
    return
  }
  func.func @transform_0(%arg0: i32) -> (i32, i32) {
    %c0_i32 = arith.constant 0 : i32
    %c0_i32_0 = arith.constant 0 : i32
    return %arg0, %c0_i32 : i32, i32
  }
  func.func @transform_1(%arg0: i32) -> (i32, i32) {
    %c0_i32 = arith.constant 0 : i32
    %c0_i32_0 = arith.constant 0 : i32
    %c0_i32_1 = arith.constant 0 : i32
    return %c0_i32, %c0_i32_0 : i32, i32
  }
  func.func @transform_2(%arg0: i32) -> (i32, i32) {
    %c0_i32 = arith.constant 0 : i32
    %c0_i32_0 = arith.constant 0 : i32
    %c0_i32_1 = arith.constant 0 : i32
    return %c0_i32, %c0_i32_0 : i32, i32
  }
  func.func @transform_3(%arg0: i32) -> (i32, i32) {
    %c0_i32 = arith.constant 0 : i32
    %c0_i32_0 = arith.constant 0 : i32
    %c0_i32_1 = arith.constant 0 : i32
    return %c0_i32, %c0_i32_0 : i32, i32
  }
  func.func @transform_4(%arg0: i32) -> (i32, i32) {
    %c0_i32 = arith.constant 0 : i32
    %c0_i32_0 = arith.constant 0 : i32
    %c0_i32_1 = arith.constant 0 : i32
    return %c0_i32, %c0_i32_0 : i32, i32
  }
  func.func @transform_5(%arg0: i32) -> (i32, i32) {
    %c0_i32 = arith.constant 0 : i32
    %c0_i32_0 = arith.constant 0 : i32
    return %arg0, %c0_i32 : i32, i32
  }
}

</mosaic_0001>

<llo_original>
// kernel: net_forward.1
$region0: #{net_forward.1}
  #allocation0 [shape = 'u32[]', space=smem, size = 0x4, offset = 0x4, fixed_abs, tag = 'smem constant byte address 0x4 - core index']
  #allocation1 [shape = 'u32[144,128]{1,0:T(1,128)}', space=vmem, size = 0x12000, scoped, tag = 'internal scratch']
  %s0 = inlined_call_operand.vmem [shape: f32[512,32], index: 0, kind: input, shape index: {}]
  %s1 = inlined_call_operand.vmem [shape: bf16[32,128], index: 1, kind: input, shape index: {}]
  %s2 = inlined_call_operand.vmem [shape: f32[1,128], index: 2, kind: input, shape index: {}]
  %s3 = inlined_call_operand.vmem [shape: bf16[128,128], index: 3, kind: input, shape index: {}]
  %s4 = inlined_call_operand.vmem [shape: f32[1,128], index: 4, kind: input, shape index: {}]
  %s5 = inlined_call_operand.vmem [shape: f32[512,16], index: 5, kind: output, shape index: {}]
  %s6 = sld [smem:[#allocation0]]
  $region53: #{net_forward.1} parent=0
    _
  %s8 = ssub.s32 1, %s6
  %s9 = scalar_select 0, %s8, %s6
  loop: start=0, step=1, limit=4
  $region2: #{net_forward.1} parent=0 // loop_pre_header
    _
  $region3: #{net_forward.1} parent=0 // loop_header
    %s11 = sphi 0, %s15
    %p12 = scmp.ge.s32.totalorder %s11, 4
    %s21 = sphi 0, %s23
    %s24 = sphi 0, %s21
    %s25 = sphi 0, %s24
    %s41 = sphi 0, %s25
    %s45 = sphi 0, %s45
    %s47 = sphi 0, %s45
    %s48 = sphi 0, %s47
    %s62 = sphi 0, %s48
    %s66 = sphi 0, %s66
    %s68 = sphi 0, %s66
    %s69 = sphi 0, %s68
    %s83 = sphi 0, %s69
    %s87 = sphi 0, %s87
    %s89 = sphi 0, %s87
    %s90 = sphi 0, %s89
    %s104 = sphi 0, %s90
    %s108 = sphi 0, %s108
    %s110 = sphi 0, %s108
    %s111 = sphi 0, %s110
    %s125 = sphi 0, %s111
    %s131 = sphi 0, %s133
    %s134 = sphi 0, %s131
    %s135 = sphi 0, %s134
    %s151 = sphi 0, %s135
  $region4: #{net_forward.1} parent=0 // loop_header_branch
    %14 = sbr.rel (%p12) target = $region8
  $region5: #{net_forward.1} parent=0 // loop_body
    %s16 = ssub.s32 %s11, 1
    %s17 = ssub.s32 %s11, 2
    %s18 = sadd.s32 %s11, 1
    %s19 = ssub.s32 %s11, %s18
    %p20 = scmp.eq.s32.totalorder %s19, 0
    %s22 = sadd.s32 %s21, 1
    %s23 = scalar_select %p20, %s21, %s22
    %p26 = pneg %p20
    %p27 = scmp.eq.s32.totalorder %s11, 1
    %p28 = por %p26, %p27
    %p29 = scmp.ne.s32.totalorder %s21, %s24
    %p30 = scmp.eq.s32.totalorder %s11, 0
    %p31 = por %p29, %p30
    %p32 = scmp.ne.s32.totalorder %s21, %s24
    %p33 = scmp.eq.s32.totalorder %s16, 1
    %p34 = por %p32, %p33
    %p35 = scmp.ne.s32.totalorder %s24, %s25
    %p36 = scmp.eq.s32.totalorder %s16, 0
    %p37 = por %p35, %p36
    %p38 = scmp.ne.s32.totalorder %s24, %s25
    %p39 = scmp.eq.s32.totalorder %s17, 1
    %p40 = por %p38, %p39
    %p42 = scmp.ne.s32.totalorder %s25, %s41
    %p43 = scmp.eq.s32.totalorder %s17, 0
    %p44 = por %p42, %p43
    %s46 = sadd.s32 %s45, 1
    %p49 = scmp.eq.s32.totalorder %s11, 1
    %p50 = scmp.ne.s32.totalorder %s45, %s47
    %p51 = scmp.eq.s32.totalorder %s11, 0
    %p52 = por %p50, %p51
    %p53 = scmp.ne.s32.totalorder %s45, %s47
    %p54 = scmp.eq.s32.totalorder %s16, 1
    %p55 = por %p53, %p54
    %p56 = scmp.ne.s32.totalorder %s47, %s48
    %p57 = scmp.eq.s32.totalorder %s16, 0
    %p58 = por %p56, %p57
    %p59 = scmp.ne.s32.totalorder %s47, %s48
    %p60 = scmp.eq.s32.totalorder %s17, 1
    %p61 = por %p59, %p60
    %p63 = scmp.ne.s32.totalorder %s48, %s62
    %p64 = scmp.eq.s32.totalorder %s17, 0
    %p65 = por %p63, %p64
    %s67 = sadd.s32 %s66, 1
    %p70 = scmp.eq.s32.totalorder %s11, 1
    %p71 = scmp.ne.s32.totalorder %s66, %s68
    %p72 = scmp.eq.s32.totalorder %s11, 0
    %p73 = por %p71, %p72
    %p74 = scmp.ne.s32.totalorder %s66, %s68
    %p75 = scmp.eq.s32.totalorder %s16, 1
    %p76 = por %p74, %p75
    %p77 = scmp.ne.s32.totalorder %s68, %s69
    %p78 = scmp.eq.s32.totalorder %s16, 0
    %p79 = por %p77, %p78
    %p80 = scmp.ne.s32.totalorder %s68, %s69
    %p81 = scmp.eq.s32.totalorder %s17, 1
    %p82 = por %p80, %p81
    %p84 = scmp.ne.s32.totalorder %s69, %s83
    %p85 = scmp.eq.s32.totalorder %s17, 0
    %p86 = por %p84, %p85
    %s88 = sadd.s32 %s87, 1
    %p91 = scmp.eq.s32.totalorder %s11, 1
    %p92 = scmp.ne.s32.totalorder %s87, %s89
    %p93 = scmp.eq.s32.totalorder %s11, 0
    %p94 = por %p92, %p93
    %p95 = scmp.ne.s32.totalorder %s87, %s89
    %p96 = scmp.eq.s32.totalorder %s16, 1
    %p97 = por %p95, %p96
    %p98 = scmp.ne.s32.totalorder %s89, %s90
    %p99 = scmp.eq.s32.totalorder %s16, 0
    %p100 = por %p98, %p99
    %p101 = scmp.ne.s32.totalorder %s89, %s90
    %p102 = scmp.eq.s32.totalorder %s17, 1
    %p103 = por %p101, %p102
    %p105 = scmp.ne.s32.totalorder %s90, %s104
    %p106 = scmp.eq.s32.totalorder %s17, 0
    %p107 = por %p105, %p106
    %s109 = sadd.s32 %s108, 1
    %p112 = scmp.eq.s32.totalorder %s11, 1
    %p113 = scmp.ne.s32.totalorder %s108, %s110
    %p114 = scmp.eq.s32.totalorder %s11, 0
    %p115 = por %p113, %p114
    %p116 = scmp.ne.s32.totalorder %s108, %s110
    %p117 = scmp.eq.s32.totalorder %s16, 1
    %p118 = por %p116, %p117
    %p119 = scmp.ne.s32.totalorder %s110, %s111
    %p120 = scmp.eq.s32.totalorder %s16, 0
    %p121 = por %p119, %p120
    %p122 = scmp.ne.s32.totalorder %s110, %s111
    %p123 = scmp.eq.s32.totalorder %s17, 1
    %p124 = por %p122, %p123
    %p126 = scmp.ne.s32.totalorder %s111, %s125
    %p127 = scmp.eq.s32.totalorder %s17, 0
    %p128 = por %p126, %p127
    %s129 = ssub.s32 %s11, %s18
    %p130 = scmp.eq.s32.totalorder %s129, 0
    %s132 = sadd.s32 %s131, 1
    %s133 = scalar_select %p130, %s131, %s132
    %p136 = pneg %p130
    %p137 = scmp.eq.s32.totalorder %s11, 1
    %p138 = por %p136, %p137
    %p139 = scmp.ne.s32.totalorder %s131, %s134
    %p140 = scmp.eq.s32.totalorder %s11, 0
    %p141 = por %p139, %p140
    %p142 = scmp.ne.s32.totalorder %s131, %s134
    %p143 = scmp.eq.s32.totalorder %s16, 1
    %p144 = por %p142, %p143
    %p145 = scmp.ne.s32.totalorder %s134, %s135
    %p146 = scmp.eq.s32.totalorder %s16, 0
    %p147 = por %p145, %p146
    %p148 = scmp.ne.s32.totalorder %s134, %s135
    %p149 = scmp.eq.s32.totalorder %s17, 1
    %p150 = por %p148, %p149
    %p152 = scmp.ne.s32.totalorder %s135, %s151
    %p153 = scmp.eq.s32.totalorder %s17, 0
    %p154 = por %p152, %p153
    %p155 = scmp.le.s32.totalorder 1, %s11
    %p156 = scmp.lt.s32.totalorder %s11, 3
    %p157 = pnand %p155, %p156
    %p158 = pneg %p157
    // Predicated region
    $region9: #{net_forward.1} parent=5 // pred_check
      _
    $region10: #{net_forward.1} parent=5 // pred_check_branch
      %160 = sbr.rel (%p157) target = $region12
    $region11: #{net_forward.1} parent=5 // pred_region
      %s161 = ssub.s32 %s11, 1
      // Predicated region
      $region13: #{net_forward.1} parent=11 // pred_check
        %p162 = pneg %p58
      $region14: #{net_forward.1} parent=11 // pred_check_branch
        %164 = sbr.rel (%p162) target = $region16
      $region15: #{net_forward.1} parent=11 // pred_region
        _
      $region16: #{net_forward.1} parent=11 // pred_fallthru
        _
      // Predicated region
      $region17: #{net_forward.1} parent=11 // pred_check
        %p165 = pneg %p79
      $region18: #{net_forward.1} parent=11 // pred_check_branch
        %167 = sbr.rel (%p165) target = $region20
      $region19: #{net_forward.1} parent=11 // pred_region
        _
      $region20: #{net_forward.1} parent=11 // pred_fallthru
        _
      // Predicated region
      $region21: #{net_forward.1} parent=11 // pred_check
        %p168 = pneg %p100
      $region22: #{net_forward.1} parent=11 // pred_check_branch
        %170 = sbr.rel (%p168) target = $region24
      $region23: #{net_forward.1} parent=11 // pred_region
        _
      $region24: #{net_forward.1} parent=11 // pred_fallthru
        _
      // Predicated region
      $region25: #{net_forward.1} parent=11 // pred_check
        %p171 = pneg %p121
      $region26: #{net_forward.1} parent=11 // pred_check_branch
        %173 = sbr.rel (%p171) target = $region28
      $region27: #{net_forward.1} parent=11 // pred_region
        _
      $region28: #{net_forward.1} parent=11 // pred_fallthru
        _
    $region12: #{net_forward.1} parent=5 // pred_fallthru
      _
    %p174 = scmp.lt.s32.totalorder %s11, 2
    // Predicated region
    $region29: #{net_forward.1} parent=5 // pred_check
      %p175 = pneg %p174
    $region30: #{net_forward.1} parent=5 // pred_check_branch
      %177 = sbr.rel (%p175) target = $region32
    $region31: #{net_forward.1} parent=5 // pred_region
      // Predicated region
      $region33: #{net_forward.1} parent=31 // pred_check
        %p178 = pneg %p31
      $region34: #{net_forward.1} parent=31 // pred_check_branch
        %180 = sbr.rel (%p178) target = $region36
      $region35: #{net_forward.1} parent=31 // pred_region
        %s181 = smul.u32 32, %s11
        %p182 = scmp.lt.s32.totalorder %s181, 63
        %s183 = scalar_select %p182, %s181, 63
        %s184 = smul.addr %s183, 8
        %s185 = scalar_lea.vmem %s0, %s184
        %s186 = smul.u32 32, %s11
      $region36: #{net_forward.1} parent=31 // pred_fallthru
        _
    $region32: #{net_forward.1} parent=5 // pred_fallthru
      _
    %p187 = scmp.le.s32.totalorder 1, %s11
    %p188 = scmp.lt.s32.totalorder %s11, 3
    %p189 = pnand %p187, %p188
    %p190 = pneg %p189
    // Predicated region
    $region37: #{net_forward.1} parent=5 // pred_check
      _
    $region38: #{net_forward.1} parent=5 // pred_check_branch
      %192 = sbr.rel (%p189) target = $region40
    $region39: #{net_forward.1} parent=5 // pred_region
      %s193 = ssub.s32 %s11, 1
      %s194 = smul.u32 32, %s16
      %p195 = scmp.lt.s32.totalorder %s194, 63
      %s196 = scalar_select %p195, %s194, 63
      %s197 = smul.addr %s196, 8
      %s198 = scalar_lea.vmem %s0, %s197
      %p199 = pneg %p37
      %p200 = pneg %p34
      %p201 = pneg %p58
      %p202 = pneg %p55
      %p203 = pneg %p79
      %p204 = pneg %p76
      %p205 = pneg %p100
      %p206 = pneg %p97
      %p207 = pneg %p121
      %p208 = pneg %p118
      %p209 = pneg %p147
      %p210 = pneg %p144
      %s211 = smul.u32 32, %s16
      %p212 = scmp.lt.s32.totalorder %s211, 63
      %s213 = scalar_select %p212, %s211, 63
      %s214 = smul.addr %s213, 8
      %s215 = scalar_lea.vmem %s5, %s214
      %s216 = smul.u32 32, %s16
      %p217 = scmp.lt.s32.totalorder %s216, 63
      %s218 = scalar_select %p217, %s216, 63
      %s219 = smul.addr %s218, 8
      %s220 = scalar_lea.vmem %s0, %s219
      %s221 = smul.u32 32, %s16
      %s222 = smul.u32 32, %s16
      %p223 = scmp.lt.s32.totalorder %s222, 63
      %s224 = scalar_select %p223, %s222, 63
      %s225 = smul.addr %s224, 8
      %s226 = scalar_lea.vmem %s5, %s225
      %s227 = smul.u32 32, %s16
      %v229 = vld [vmem:[%s220] sm:$0xff]
      %v230 = vld [vmem:[%s220 + $0x8] sm:$0xff]
      %v231 = vld [vmem:[%s220 + $0x10] sm:$0xff]
      %v232 = vld [vmem:[%s220 + $0x18] sm:$0xff]
      %v233 = vld [vmem:[%s220 + $0x20] sm:$0xff]
      %v234 = vld [vmem:[%s220 + $0x28] sm:$0xff]
      %v235 = vld [vmem:[%s220 + $0x30] sm:$0xff]
      %v236 = vld [vmem:[%s220 + $0x38] sm:$0xff]
      %v237 = vld [vmem:[%s220 + $0x40] sm:$0xff]
      %v238 = vld [vmem:[%s220 + $0x48] sm:$0xff]
      %v239 = vld [vmem:[%s220 + $0x50] sm:$0xff]
      %v240 = vld [vmem:[%s220 + $0x58] sm:$0xff]
      %v241 = vld [vmem:[%s220 + $0x60] sm:$0xff]
      %v242 = vld [vmem:[%s220 + $0x68] sm:$0xff]
      %v243 = vld [vmem:[%s220 + $0x70] sm:$0xff]
      %v244 = vld [vmem:[%s220 + $0x78] sm:$0xff]
      %v245 = vld [vmem:[%s220 + $0x80] sm:$0xff]
      %v246 = vld [vmem:[%s220 + $0x88] sm:$0xff]
      %v247 = vld [vmem:[%s220 + $0x90] sm:$0xff]
      %v248 = vld [vmem:[%s220 + $0x98] sm:$0xff]
      %v249 = vld [vmem:[%s220 + $0xa0] sm:$0xff]
      %v250 = vld [vmem:[%s220 + $0xa8] sm:$0xff]
      %v251 = vld [vmem:[%s220 + $0xb0] sm:$0xff]
      %v252 = vld [vmem:[%s220 + $0xb8] sm:$0xff]
      %v253 = vld [vmem:[%s220 + $0xc0] sm:$0xff]
      %v254 = vld [vmem:[%s220 + $0xc8] sm:$0xff]
      %v255 = vld [vmem:[%s220 + $0xd0] sm:$0xff]
      %v256 = vld [vmem:[%s220 + $0xd8] sm:$0xff]
      %v257 = vld [vmem:[%s220 + $0xe0] sm:$0xff]
      %v258 = vld [vmem:[%s220 + $0xe8] sm:$0xff]
      %v259 = vld [vmem:[%s220 + $0xf0] sm:$0xff]
      %v260 = vld [vmem:[%s220 + $0xf8] sm:$0xff]
      %v261 = vpack.c.bf16 %v230, %v229
      %v262 = vpack.c.bf16 %v232, %v231
      %v263 = vpack.c.bf16 %v234, %v233
      %v264 = vpack.c.bf16 %v236, %v235
      %v265 = vpack.c.bf16 %v238, %v237
      %v266 = vpack.c.bf16 %v240, %v239
      %v267 = vpack.c.bf16 %v242, %v241
      %v268 = vpack.c.bf16 %v244, %v243
      %v269 = vpack.c.bf16 %v246, %v245
      %v270 = vpack.c.bf16 %v248, %v247
      %v271 = vpack.c.bf16 %v250, %v249
      %v272 = vpack.c.bf16 %v252, %v251
      %v273 = vpack.c.bf16 %v254, %v253
      %v274 = vpack.c.bf16 %v256, %v255
      %v275 = vpack.c.bf16 %v258, %v257
      %v276 = vpack.c.bf16 %v260, %v259
      %v277 = vld [vmem:[%s1] sm:$0xf]
      %v278 = vld [vmem:[%s1 + $0x4] sm:$0xf]
      %v279 = vld [vmem:[%s1 + $0x8] sm:$0xf]
      %v280 = vld [vmem:[%s1 + $0xc] sm:$0xf]
      %v281 = vld [vmem:[%s2] sm:$0x1]
      %v283 = vlaneseq
      %v284 = vshrl.u32 %v283, 7
      %v285 = vsub.s32 0, %v284
      %v286 = vrot.slane %v281, %v285
      %v292 = vunpack.c.l.b16 %v277
      %v293 = vunpack.c.l.b16 %v278
      %v294 = vunpack.c.l.b16 %v279
      %v295 = vunpack.c.l.b16 %v280
      %v296 = vpack.c.b16 %v293, %v292
      %v297 = vpack.c.b16 %v295, %v294
      %vm300 = vcmask 261120
      %v302 = vsel %vm300, %v261, 0
      %v305 = vsel %vm300, %v262, 0
      %v308 = vsel %vm300, %v263, 0
      %v311 = vsel %vm300, %v264, 0
      %v314 = vsel %vm300, %v265, 0
      %v317 = vsel %vm300, %v266, 0
      %v320 = vsel %vm300, %v267, 0
      %v323 = vsel %vm300, %v268, 0
      %v326 = vsel %vm300, %v269, 0
      %v329 = vsel %vm300, %v270, 0
      %v332 = vsel %vm300, %v271, 0
      %v335 = vsel %vm300, %v272, 0
      %v338 = vsel %vm300, %v273, 0
      %v341 = vsel %vm300, %v274, 0
      %v344 = vsel %vm300, %v275, 0
      %v347 = vsel %vm300, %v276, 0
      %349 = vmatprep.subr.bf16.mxu0 0
      %350 = vmatpush1.bf16.msra.mxu0 0
      %351 = vmatprep.subr.bf16.mxu0 0
      %352 = vmatpush1.bf16.msra.mxu0 0
      %353 = vmatprep.subr.bf16.mxu0 0
      %354 = vmatpush1.bf16.msra.mxu0 0
      %355 = vmatprep.subr.bf16.mxu0 0
      %356 = vmatpush1.bf16.msra.mxu0 0
      %357 = vmatprep.subr.bf16.mxu0 0
      %358 = vmatpush1.bf16.msra.mxu0 0
      %359 = vmatprep.subr.bf16.mxu0 0
      %360 = vmatpush1.bf16.msra.mxu0 0
      %361 = vmatprep.subr.bf16.mxu0 0
      %362 = vmatpush1.bf16.msra.mxu0 %v297
      %363 = vmatprep.subr.bf16.mxu0 0
      %364 = vmatpush1.bf16.msra.mxu0 %v296
      %365 = vmatprep.subr.bf16.mxu0 0
      %366 = vmatpush2.bf16.msra.mxu0 0
      %367 = vmatprep.subr.bf16.mxu0 0
      %368 = vmatpush2.bf16.msra.mxu0 0
      %369 = vmatprep.subr.bf16.mxu0 0
      %370 = vmatpush2.bf16.msra.mxu0 0
      %371 = vmatprep.subr.bf16.mxu0 0
      %372 = vmatpush2.bf16.msra.mxu0 0
      %373 = vmatprep.subr.bf16.mxu0 0
      %374 = vmatpush2.bf16.msra.mxu0 0
      %375 = vmatprep.subr.bf16.mxu0 0
      %376 = vmatpush2.bf16.msra.mxu0 0
      %377 = vmatprep.subr.bf16.mxu0 0
      %378 = vmatpush2.bf16.msra.mxu0 0
      %379 = vmatprep.subr.bf16.mxu0 0
      %380 = vmatpush2.bf16.msra.mxu0 0
      %381 = vmatprep.mubr.bf16.mxu0 0
      %382 = vmatmul.mubr.bf16.gmra.mxu0 %v302
      %v383 = vpop.f32.mrf.mxu0
      %v384 = vadd.f32 %v286, %v383
      %v385 = vpop.f32.mrf.mxu0
      %v386 = vpop.f32.mrf.mxu0
      %v387 = vadd.f32 %v286, %v386
      %v388 = vpop.f32.mrf.mxu0
      %389 = vmatprep.mubr.bf16.mxu0 0
      %390 = vmatmul.mubr.bf16.gmra.mxu0 %v305
      %v391 = vpop.f32.mrf.mxu0
      %v392 = vadd.f32 %v286, %v391
      %v393 = vpop.f32.mrf.mxu0
      %v394 = vpop.f32.mrf.mxu0
      %v395 = vadd.f32 %v286, %v394
      %v396 = vpop.f32.mrf.mxu0
      %397 = vmatprep.mubr.bf16.mxu0 0
      %398 = vmatmul.mubr.bf16.gmra.mxu0 %v308
      %v399 = vpop.f32.mrf.mxu0
      %v400 = vadd.f32 %v286, %v399
      %v401 = vpop.f32.mrf.mxu0
      %v402 = vpop.f32.mrf.mxu0
      %v403 = vadd.f32 %v286, %v402
      %v404 = vpop.f32.mrf.mxu0
      %405 = vmatprep.mubr.bf16.mxu0 0
      %406 = vmatmul.mubr.bf16.gmra.mxu0 %v311
      %v407 = vpop.f32.mrf.mxu0
      %v408 = vadd.f32 %v286, %v407
      %v409 = vpop.f32.mrf.mxu0
      %v410 = vpop.f32.mrf.mxu0
      %v411 = vadd.f32 %v286, %v410
      %v412 = vpop.f32.mrf.mxu0
      %413 = vmatprep.mubr.bf16.mxu0 0
      %414 = vmatmul.mubr.bf16.gmra.mxu0 %v314
      %v415 = vpop.f32.mrf.mxu0
      %v416 = vadd.f32 %v286, %v415
      %v417 = vpop.f32.mrf.mxu0
      %v418 = vpop.f32.mrf.mxu0
      %v419 = vadd.f32 %v286, %v418
      %v420 = vpop.f32.mrf.mxu0
      %421 = vmatprep.mubr.bf16.mxu0 0
      %422 = vmatmul.mubr.bf16.gmra.mxu0 %v317
      %v423 = vpop.f32.mrf.mxu0
      %v424 = vadd.f32 %v286, %v423
      %v425 = vpop.f32.mrf.mxu0
      %v426 = vpop.f32.mrf.mxu0
      %v427 = vadd.f32 %v286, %v426
      %v428 = vpop.f32.mrf.mxu0
      %429 = vmatprep.mubr.bf16.mxu0 0
      %430 = vmatmul.mubr.bf16.gmra.mxu0 %v320
      %v431 = vpop.f32.mrf.mxu0
      %v432 = vadd.f32 %v286, %v431
      %v433 = vpop.f32.mrf.mxu0
      %v434 = vpop.f32.mrf.mxu0
      %v435 = vadd.f32 %v286, %v434
      %v436 = vpop.f32.mrf.mxu0
      %437 = vmatprep.mubr.bf16.mxu0 0
      %438 = vmatmul.mubr.bf16.gmra.mxu0 %v323
      %v439 = vpop.f32.mrf.mxu0
      %v440 = vadd.f32 %v286, %v439
      %v441 = vpop.f32.mrf.mxu0
      %v442 = vpop.f32.mrf.mxu0
      %v443 = vadd.f32 %v286, %v442
      %v444 = vpop.f32.mrf.mxu0
      %445 = vmatprep.mubr.bf16.mxu0 0
      %446 = vmatmul.mubr.bf16.gmra.mxu0 %v326
      %v447 = vpop.f32.mrf.mxu0
      %v448 = vadd.f32 %v286, %v447
      %v449 = vpop.f32.mrf.mxu0
      %v450 = vpop.f32.mrf.mxu0
      %v451 = vadd.f32 %v286, %v450
      %v452 = vpop.f32.mrf.mxu0
      %453 = vmatprep.mubr.bf16.mxu0 0
      %454 = vmatmul.mubr.bf16.gmra.mxu0 %v329
      %v455 = vpop.f32.mrf.mxu0
      %v456 = vadd.f32 %v286, %v455
      %v457 = vpop.f32.mrf.mxu0
      %v458 = vpop.f32.mrf.mxu0
      %v459 = vadd.f32 %v286, %v458
      %v460 = vpop.f32.mrf.mxu0
      %461 = vmatprep.mubr.bf16.mxu0 0
      %462 = vmatmul.mubr.bf16.gmra.mxu0 %v332
      %v463 = vpop.f32.mrf.mxu0
      %v464 = vadd.f32 %v286, %v463
      %v465 = vpop.f32.mrf.mxu0
      %v466 = vpop.f32.mrf.mxu0
      %v467 = vadd.f32 %v286, %v466
      %v468 = vpop.f32.mrf.mxu0
      %469 = vmatprep.mubr.bf16.mxu0 0
      %470 = vmatmul.mubr.bf16.gmra.mxu0 %v335
      %v471 = vpop.f32.mrf.mxu0
      %v472 = vadd.f32 %v286, %v471
      %v473 = vpop.f32.mrf.mxu0
      %v474 = vpop.f32.mrf.mxu0
      %v475 = vadd.f32 %v286, %v474
      %v476 = vpop.f32.mrf.mxu0
      %477 = vmatprep.mubr.bf16.mxu0 0
      %478 = vmatmul.mubr.bf16.gmra.mxu0 %v338
      %v479 = vpop.f32.mrf.mxu0
      %v480 = vadd.f32 %v286, %v479
      %v481 = vpop.f32.mrf.mxu0
      %v482 = vpop.f32.mrf.mxu0
      %v483 = vadd.f32 %v286, %v482
      %v484 = vpop.f32.mrf.mxu0
      %485 = vmatprep.mubr.bf16.mxu0 0
      %486 = vmatmul.mubr.bf16.gmra.mxu0 %v341
      %v487 = vpop.f32.mrf.mxu0
      %v488 = vadd.f32 %v286, %v487
      %v489 = vpop.f32.mrf.mxu0
      %v490 = vpop.f32.mrf.mxu0
      %v491 = vadd.f32 %v286, %v490
      %v492 = vpop.f32.mrf.mxu0
      %493 = vmatprep.mubr.bf16.mxu0 0
      %494 = vmatmul.mubr.bf16.gmra.mxu0 %v344
      %v495 = vpop.f32.mrf.mxu0
      %v496 = vadd.f32 %v286, %v495
      %v497 = vpop.f32.mrf.mxu0
      %v498 = vpop.f32.mrf.mxu0
      %v499 = vadd.f32 %v286, %v498
      %v500 = vpop.f32.mrf.mxu0
      %501 = vmatprep.mubr.bf16.mxu0 0
      %502 = vmatmul.mubr.bf16.gmra.mxu0 %v347
      %v503 = vpop.f32.mrf.mxu0
      %v504 = vadd.f32 %v286, %v503
      %v505 = vpop.f32.mrf.mxu0
      %v506 = vpop.f32.mrf.mxu0
      %v507 = vadd.f32 %v286, %v506
      %v508 = vpop.f32.mrf.mxu0
      %509 = vdwg.mxu0
      %v510 = vtanh.pop %v384
      %v511 = vtanh.pop %v387
      %v512 = vtanh.pop %v392
      %v513 = vtanh.pop %v395
      %v514 = vtanh.pop %v400
      %v515 = vtanh.pop %v403
      %v516 = vtanh.pop %v408
      %v517 = vtanh.pop %v411
      %v518 = vtanh.pop %v416
      %v519 = vtanh.pop %v419
      %v520 = vtanh.pop %v424
      %v521 = vtanh.pop %v427
      %v522 = vtanh.pop %v432
      %v523 = vtanh.pop %v435
      %v524 = vtanh.pop %v440
      %v525 = vtanh.pop %v443
      %v526 = vtanh.pop %v448
      %v527 = vtanh.pop %v451
      %v528 = vtanh.pop %v456
      %v529 = vtanh.pop %v459
      %v530 = vtanh.pop %v464
      %v531 = vtanh.pop %v467
      %v532 = vtanh.pop %v472
      %v533 = vtanh.pop %v475
      %v534 = vtanh.pop %v480
      %v535 = vtanh.pop %v483
      %v536 = vtanh.pop %v488
      %v537 = vtanh.pop %v491
      %v538 = vtanh.pop %v496
      %v539 = vtanh.pop %v499
      %v540 = vtanh.pop %v504
      %v541 = vtanh.pop %v507
      %v542 = vpack.c.bf16 %v511, %v510
      %v543 = vpack.c.bf16 %v513, %v512
      %v544 = vpack.c.bf16 %v515, %v514
      %v545 = vpack.c.bf16 %v517, %v516
      %v546 = vpack.c.bf16 %v519, %v518
      %v547 = vpack.c.bf16 %v521, %v520
      %v548 = vpack.c.bf16 %v523, %v522
      %v549 = vpack.c.bf16 %v525, %v524
      %v550 = vpack.c.bf16 %v527, %v526
      %v551 = vpack.c.bf16 %v529, %v528
      %v552 = vpack.c.bf16 %v531, %v530
      %v553 = vpack.c.bf16 %v533, %v532
      %v554 = vpack.c.bf16 %v535, %v534
      %v555 = vpack.c.bf16 %v537, %v536
      %v556 = vpack.c.bf16 %v539, %v538
      %v557 = vpack.c.bf16 %v541, %v540
      %v558 = vld [vmem:[%s3] sm:$0xf]
      %v559 = vld [vmem:[%s3 + $0x4] sm:$0xf]
      %v560 = vld [vmem:[%s3 + $0x8] sm:$0xf]
      %v561 = vld [vmem:[%s3 + $0xc] sm:$0xf]
      %v562 = vld [vmem:[%s3 + $0x10] sm:$0xf]
      %v563 = vld [vmem:[%s3 + $0x14] sm:$0xf]
      %v564 = vld [vmem:[%s3 + $0x18] sm:$0xf]
      %v565 = vld [vmem:[%s3 + $0x1c] sm:$0xf]
      %v566 = vld [vmem:[%s3 + $0x20] sm:$0xf]
      %v567 = vld [vmem:[%s3 + $0x24] sm:$0xf]
      %v568 = vld [vmem:[%s3 + $0x28] sm:$0xf]
      %v569 = vld [vmem:[%s3 + $0x2c] sm:$0xf]
      %v570 = vld [vmem:[%s3 + $0x30] sm:$0xf]
      %v571 = vld [vmem:[%s3 + $0x34] sm:$0xf]
      %v572 = vld [vmem:[%s3 + $0x38] sm:$0xf]
      %v573 = vld [vmem:[%s3 + $0x3c] sm:$0xf]
      %v574 = vld [vmem:[%s4] sm:$0x1]
      %v576 = vlaneseq
      %v577 = vshrl.u32 %v576, 7
      %v578 = vsub.s32 0, %v577
      %v579 = vrot.slane %v574, %v578
      %v597 = vunpack.c.l.b16 %v558
      %v598 = vunpack.c.l.b16 %v559
      %v599 = vunpack.c.l.b16 %v560
      %v600 = vunpack.c.l.b16 %v561
      %v601 = vunpack.c.l.b16 %v562
      %v602 = vunpack.c.l.b16 %v563
      %v603 = vunpack.c.l.b16 %v564
      %v604 = vunpack.c.l.b16 %v565
      %v605 = vunpack.c.l.b16 %v566
      %v606 = vunpack.c.l.b16 %v567
      %v607 = vunpack.c.l.b16 %v568
      %v608 = vunpack.c.l.b16 %v569
      %v609 = vunpack.c.l.b16 %v570
      %v610 = vunpack.c.l.b16 %v571
      %v611 = vunpack.c.l.b16 %v572
      %v612 = vunpack.c.l.b16 %v573
      %v613 = vpack.c.b16 %v598, %v597
      %v614 = vpack.c.b16 %v600, %v599
      %v615 = vpack.c.b16 %v602, %v601
      %v616 = vpack.c.b16 %v604, %v603
      %v617 = vpack.c.b16 %v606, %v605
      %v618 = vpack.c.b16 %v608, %v607
      %v619 = vpack.c.b16 %v610, %v609
      %v620 = vpack.c.b16 %v612, %v611
      %629 = vmatprep.subr.bf16.mxu0 0
      %630 = vmatpush1.bf16.msra.mxu0 %v620
      %631 = vmatprep.subr.bf16.mxu0 0
      %632 = vmatpush1.bf16.msra.mxu0 %v619
      %633 = vmatprep.subr.bf16.mxu0 0
      %634 = vmatpush1.bf16.msra.mxu0 %v618
      %635 = vmatprep.subr.bf16.mxu0 0
      %636 = vmatpush1.bf16.msra.mxu0 %v617
      %637 = vmatprep.subr.bf16.mxu0 0
      %638 = vmatpush1.bf16.msra.mxu0 %v616
      %639 = vmatprep.subr.bf16.mxu0 0
      %640 = vmatpush1.bf16.msra.mxu0 %v615
      %641 = vmatprep.subr.bf16.mxu0 0
      %642 = vmatpush1.bf16.msra.mxu0 %v614
      %643 = vmatprep.subr.bf16.mxu0 0
      %644 = vmatpush1.bf16.msra.mxu0 %v613
      %645 = vmatprep.subr.bf16.mxu0 0
      %646 = vmatpush2.bf16.msra.mxu0 0
      %647 = vmatprep.subr.bf16.mxu0 0
      %648 = vmatpush2.bf16.msra.mxu0 0
      %649 = vmatprep.subr.bf16.mxu0 0
      %650 = vmatpush2.bf16.msra.mxu0 0
      %651 = vmatprep.subr.bf16.mxu0 0
      %652 = vmatpush2.bf16.msra.mxu0 0
      %653 = vmatprep.subr.bf16.mxu0 0
      %654 = vmatpush2.bf16.msra.mxu0 0
      %655 = vmatprep.subr.bf16.mxu0 0
      %656 = vmatpush2.bf16.msra.mxu0 0
      %657 = vmatprep.subr.bf16.mxu0 0
      %658 = vmatpush2.bf16.msra.mxu0 0
      %659 = vmatprep.subr.bf16.mxu0 0
      %660 = vmatpush2.bf16.msra.mxu0 0
      %661 = vmatprep.mubr.bf16.mxu0 0
      %662 = vmatmul.mubr.bf16.gmra.mxu0 %v542
      %v663 = vpop.f32.mrf.mxu0
      %v664 = vadd.f32 %v579, %v663
      %v665 = vpop.f32.mrf.mxu0
      %v666 = vpop.f32.mrf.mxu0
      %v667 = vadd.f32 %v579, %v666
      %v668 = vpop.f32.mrf.mxu0
      %669 = vmatprep.mubr.bf16.mxu0 0
      %670 = vmatmul.mubr.bf16.gmra.mxu0 %v543
      %v671 = vpop.f32.mrf.mxu0
      %v672 = vadd.f32 %v579, %v671
      %v673 = vpop.f32.mrf.mxu0
      %v674 = vpop.f32.mrf.mxu0
      %v675 = vadd.f32 %v579, %v674
      %v676 = vpop.f32.mrf.mxu0
      %677 = vmatprep.mubr.bf16.mxu0 0
      %678 = vmatmul.mubr.bf16.gmra.mxu0 %v544
      %v679 = vpop.f32.mrf.mxu0
      %v680 = vadd.f32 %v579, %v679
      %v681 = vpop.f32.mrf.mxu0
      %v682 = vpop.f32.mrf.mxu0
      %v683 = vadd.f32 %v579, %v682
      %v684 = vpop.f32.mrf.mxu0
      %685 = vmatprep.mubr.bf16.mxu0 0
      %686 = vmatmul.mubr.bf16.gmra.mxu0 %v545
      %v687 = vpop.f32.mrf.mxu0
      %v688 = vadd.f32 %v579, %v687
      %v689 = vpop.f32.mrf.mxu0
      %v690 = vpop.f32.mrf.mxu0
      %v691 = vadd.f32 %v579, %v690
      %v692 = vpop.f32.mrf.mxu0
      %693 = vmatprep.mubr.bf16.mxu0 0
      %694 = vmatmul.mubr.bf16.gmra.mxu0 %v546
      %v695 = vpop.f32.mrf.mxu0
      %v696 = vadd.f32 %v579, %v695
      %v697 = vpop.f32.mrf.mxu0
      %v698 = vpop.f32.mrf.mxu0
      %v699 = vadd.f32 %v579, %v698
      %v700 = vpop.f32.mrf.mxu0
      %701 = vmatprep.mubr.bf16.mxu0 0
      %702 = vmatmul.mubr.bf16.gmra.mxu0 %v547
      %v703 = vpop.f32.mrf.mxu0
      %v704 = vadd.f32 %v579, %v703
      %v705 = vpop.f32.mrf.mxu0
      %v706 = vpop.f32.mrf.mxu0
      %v707 = vadd.f32 %v579, %v706
      %v708 = vpop.f32.mrf.mxu0
      %709 = vmatprep.mubr.bf16.mxu0 0
      %710 = vmatmul.mubr.bf16.gmra.mxu0 %v548
      %v711 = vpop.f32.mrf.mxu0
      %v712 = vadd.f32 %v579, %v711
      %v713 = vpop.f32.mrf.mxu0
      %v714 = vpop.f32.mrf.mxu0
      %v715 = vadd.f32 %v579, %v714
      %v716 = vpop.f32.mrf.mxu0
      %717 = vmatprep.mubr.bf16.mxu0 0
      %718 = vmatmul.mubr.bf16.gmra.mxu0 %v549
      %v719 = vpop.f32.mrf.mxu0
      %v720 = vadd.f32 %v579, %v719
      %v721 = vpop.f32.mrf.mxu0
      %v722 = vpop.f32.mrf.mxu0
      %v723 = vadd.f32 %v579, %v722
      %v724 = vpop.f32.mrf.mxu0
      %725 = vmatprep.mubr.bf16.mxu0 0
      %726 = vmatmul.mubr.bf16.gmra.mxu0 %v550
      %v727 = vpop.f32.mrf.mxu0
      %v728 = vadd.f32 %v579, %v727
      %v729 = vpop.f32.mrf.mxu0
      %v730 = vpop.f32.mrf.mxu0
      %v731 = vadd.f32 %v579, %v730
      %v732 = vpop.f32.mrf.mxu0
      %733 = vmatprep.mubr.bf16.mxu0 0
      %734 = vmatmul.mubr.bf16.gmra.mxu0 %v551
      %v735 = vpop.f32.mrf.mxu0
      %v736 = vadd.f32 %v579, %v735
      %v737 = vpop.f32.mrf.mxu0
      %v738 = vpop.f32.mrf.mxu0
      %v739 = vadd.f32 %v579, %v738
      %v740 = vpop.f32.mrf.mxu0
      %741 = vmatprep.mubr.bf16.mxu0 0
      %742 = vmatmul.mubr.bf16.gmra.mxu0 %v552
      %v743 = vpop.f32.mrf.mxu0
      %v744 = vadd.f32 %v579, %v743
      %v745 = vpop.f32.mrf.mxu0
      %v746 = vpop.f32.mrf.mxu0
      %v747 = vadd.f32 %v579, %v746
      %v748 = vpop.f32.mrf.mxu0
      %749 = vmatprep.mubr.bf16.mxu0 0
      %750 = vmatmul.mubr.bf16.gmra.mxu0 %v553
      %v751 = vpop.f32.mrf.mxu0
      %v752 = vadd.f32 %v579, %v751
      %v753 = vpop.f32.mrf.mxu0
      %v754 = vpop.f32.mrf.mxu0
      %v755 = vadd.f32 %v579, %v754
      %v756 = vpop.f32.mrf.mxu0
      %757 = vmatprep.mubr.bf16.mxu0 0
      %758 = vmatmul.mubr.bf16.gmra.mxu0 %v554
      %v759 = vpop.f32.mrf.mxu0
      %v760 = vadd.f32 %v579, %v759
      %v761 = vpop.f32.mrf.mxu0
      %v762 = vpop.f32.mrf.mxu0
      %v763 = vadd.f32 %v579, %v762
      %v764 = vpop.f32.mrf.mxu0
      %765 = vmatprep.mubr.bf16.mxu0 0
      %766 = vmatmul.mubr.bf16.gmra.mxu0 %v555
      %v767 = vpop.f32.mrf.mxu0
      %v768 = vadd.f32 %v579, %v767
      %v769 = vpop.f32.mrf.mxu0
      %v770 = vpop.f32.mrf.mxu0
      %v771 = vadd.f32 %v579, %v770
      %v772 = vpop.f32.mrf.mxu0
      %773 = vmatprep.mubr.bf16.mxu0 0
      %774 = vmatmul.mubr.bf16.gmra.mxu0 %v556
      %v775 = vpop.f32.mrf.mxu0
      %v776 = vadd.f32 %v579, %v775
      %v777 = vpop.f32.mrf.mxu0
      %v778 = vpop.f32.mrf.mxu0
      %v779 = vadd.f32 %v579, %v778
      %v780 = vpop.f32.mrf.mxu0
      %781 = vmatprep.mubr.bf16.mxu0 0
      %782 = vmatmul.mubr.bf16.gmra.mxu0 %v557
      %v783 = vpop.f32.mrf.mxu0
      %v784 = vadd.f32 %v579, %v783
      %v785 = vpop.f32.mrf.mxu0
      %v786 = vpop.f32.mrf.mxu0
      %v787 = vadd.f32 %v579, %v786
      %v788 = vpop.f32.mrf.mxu0
      %789 = vdwg.mxu0
      %790 = vmax.xlane.f32.xlu0 %v664
      %v791 = vpop.xlane.xlu0 %790
      %792 = vmax.xlane.f32.xlu0 %v667
      %v793 = vpop.xlane.xlu0 %792
      %794 = vmax.xlane.f32.xlu0 %v672
      %v795 = vpop.xlane.xlu0 %794
      %796 = vmax.xlane.f32.xlu0 %v675
      %v797 = vpop.xlane.xlu0 %796
      %798 = vmax.xlane.f32.xlu0 %v680
      %v799 = vpop.xlane.xlu0 %798
      %800 = vmax.xlane.f32.xlu0 %v683
      %v801 = vpop.xlane.xlu0 %800
      %802 = vmax.xlane.f32.xlu0 %v688
      %v803 = vpop.xlane.xlu0 %802
      %804 = vmax.xlane.f32.xlu0 %v691
      %v805 = vpop.xlane.xlu0 %804
      %806 = vmax.xlane.f32.xlu0 %v696
      %v807 = vpop.xlane.xlu0 %806
      %808 = vmax.xlane.f32.xlu0 %v699
      %v809 = vpop.xlane.xlu0 %808
      %810 = vmax.xlane.f32.xlu0 %v704
      %v811 = vpop.xlane.xlu0 %810
      %812 = vmax.xlane.f32.xlu0 %v707
      %v813 = vpop.xlane.xlu0 %812
      %814 = vmax.xlane.f32.xlu0 %v712
      %v815 = vpop.xlane.xlu0 %814
      %816 = vmax.xlane.f32.xlu0 %v715
      %v817 = vpop.xlane.xlu0 %816
      %818 = vmax.xlane.f32.xlu0 %v720
      %v819 = vpop.xlane.xlu0 %818
      %820 = vmax.xlane.f32.xlu0 %v723
      %v821 = vpop.xlane.xlu0 %820
      %822 = vmax.xlane.f32.xlu0 %v728
      %v823 = vpop.xlane.xlu0 %822
      %824 = vmax.xlane.f32.xlu0 %v731
      %v825 = vpop.xlane.xlu0 %824
      %826 = vmax.xlane.f32.xlu0 %v736
      %v827 = vpop.xlane.xlu0 %826
      %828 = vmax.xlane.f32.xlu0 %v739
      %v829 = vpop.xlane.xlu0 %828
      %830 = vmax.xlane.f32.xlu0 %v744
      %v831 = vpop.xlane.xlu0 %830
      %832 = vmax.xlane.f32.xlu0 %v747
      %v833 = vpop.xlane.xlu0 %832
      %834 = vmax.xlane.f32.xlu0 %v752
      %v835 = vpop.xlane.xlu0 %834
      %836 = vmax.xlane.f32.xlu0 %v755
      %v837 = vpop.xlane.xlu0 %836
      %838 = vmax.xlane.f32.xlu0 %v760
      %v839 = vpop.xlane.xlu0 %838
      %840 = vmax.xlane.f32.xlu0 %v763
      %v841 = vpop.xlane.xlu0 %840
      %842 = vmax.xlane.f32.xlu0 %v768
      %v843 = vpop.xlane.xlu0 %842
      %844 = vmax.xlane.f32.xlu0 %v771
      %v845 = vpop.xlane.xlu0 %844
      %846 = vmax.xlane.f32.xlu0 %v776
      %v847 = vpop.xlane.xlu0 %846
      %848 = vmax.xlane.f32.xlu0 %v779
      %v849 = vpop.xlane.xlu0 %848
      %850 = vmax.xlane.f32.xlu0 %v784
      %v851 = vpop.xlane.xlu0 %850
      %852 = vmax.xlane.f32.xlu0 %v787
      %v853 = vpop.xlane.xlu0 %852
      %v854 = vsub.f32 %v664, %v791
      %v855 = vsub.f32 %v667, %v793
      %v856 = vsub.f32 %v672, %v795
      %v857 = vsub.f32 %v675, %v797
      %v858 = vsub.f32 %v680, %v799
      %v859 = vsub.f32 %v683, %v801
      %v860 = vsub.f32 %v688, %v803
      %v861 = vsub.f32 %v691, %v805
      %v862 = vsub.f32 %v696, %v807
      %v863 = vsub.f32 %v699, %v809
      %v864 = vsub.f32 %v704, %v811
      %v865 = vsub.f32 %v707, %v813
      %v866 = vsub.f32 %v712, %v815
      %v867 = vsub.f32 %v715, %v817
      %v868 = vsub.f32 %v720, %v819
      %v869 = vsub.f32 %v723, %v821
      %v870 = vsub.f32 %v728, %v823
      %v871 = vsub.f32 %v731, %v825
      %v872 = vsub.f32 %v736, %v827
      %v873 = vsub.f32 %v739, %v829
      %v874 = vsub.f32 %v744, %v831
      %v875 = vsub.f32 %v747, %v833
      %v876 = vsub.f32 %v752, %v835
      %v877 = vsub.f32 %v755, %v837
      %v878 = vsub.f32 %v760, %v839
      %v879 = vsub.f32 %v763, %v841
      %v880 = vsub.f32 %v768, %v843
      %v881 = vsub.f32 %v771, %v845
      %v882 = vsub.f32 %v776, %v847
      %v883 = vsub.f32 %v779, %v849
      %v884 = vsub.f32 %v784, %v851
      %v885 = vsub.f32 %v787, %v853
      %v886 = vmul.f32 %v854, 1.442695
      %v887 = vpow.pop %v886
      %v888 = vmul.f32 %v855, 1.442695
      %v889 = vpow.pop %v888
      %v890 = vmul.f32 %v856, 1.442695
      %v891 = vpow.pop %v890
      %v892 = vmul.f32 %v857, 1.442695
      %v893 = vpow.pop %v892
      %v894 = vmul.f32 %v858, 1.442695
      %v895 = vpow.pop %v894
      %v896 = vmul.f32 %v859, 1.442695
      %v897 = vpow.pop %v896
      %v898 = vmul.f32 %v860, 1.442695
      %v899 = vpow.pop %v898
      %v900 = vmul.f32 %v861, 1.442695
      %v901 = vpow.pop %v900
      %v902 = vmul.f32 %v862, 1.442695
      %v903 = vpow.pop %v902
      %v904 = vmul.f32 %v863, 1.442695
      %v905 = vpow.pop %v904
      %v906 = vmul.f32 %v864, 1.442695
      %v907 = vpow.pop %v906
      %v908 = vmul.f32 %v865, 1.442695
      %v909 = vpow.pop %v908
      %v910 = vmul.f32 %v866, 1.442695
      %v911 = vpow.pop %v910
      %v912 = vmul.f32 %v867, 1.442695
      %v913 = vpow.pop %v912
      %v914 = vmul.f32 %v868, 1.442695
      %v915 = vpow.pop %v914
      %v916 = vmul.f32 %v869, 1.442695
      %v917 = vpow.pop %v916
      %v918 = vmul.f32 %v870, 1.442695
      %v919 = vpow.pop %v918
      %v920 = vmul.f32 %v871, 1.442695
      %v921 = vpow.pop %v920
      %v922 = vmul.f32 %v872, 1.442695
      %v923 = vpow.pop %v922
      %v924 = vmul.f32 %v873, 1.442695
      %v925 = vpow.pop %v924
      %v926 = vmul.f32 %v874, 1.442695
      %v927 = vpow.pop %v926
      %v928 = vmul.f32 %v875, 1.442695
      %v929 = vpow.pop %v928
      %v930 = vmul.f32 %v876, 1.442695
      %v931 = vpow.pop %v930
      %v932 = vmul.f32 %v877, 1.442695
      %v933 = vpow.pop %v932
      %v934 = vmul.f32 %v878, 1.442695
      %v935 = vpow.pop %v934
      %v936 = vmul.f32 %v879, 1.442695
      %v937 = vpow.pop %v936
      %v938 = vmul.f32 %v880, 1.442695
      %v939 = vpow.pop %v938
      %v940 = vmul.f32 %v881, 1.442695
      %v941 = vpow.pop %v940
      %v942 = vmul.f32 %v882, 1.442695
      %v943 = vpow.pop %v942
      %v944 = vmul.f32 %v883, 1.442695
      %v945 = vpow.pop %v944
      %v946 = vmul.f32 %v884, 1.442695
      %v947 = vpow.pop %v946
      %v948 = vmul.f32 %v885, 1.442695
      %v949 = vpow.pop %v948
      %950 = vadd.xlane.f32.xlu0 %v887
      %v951 = vpop.xlane.xlu0 %950
      %952 = vadd.xlane.f32.xlu0 %v889
      %v953 = vpop.xlane.xlu0 %952
      %954 = vadd.xlane.f32.xlu0 %v891
      %v955 = vpop.xlane.xlu0 %954
      %956 = vadd.xlane.f32.xlu0 %v893
      %v957 = vpop.xlane.xlu0 %956
      %958 = vadd.xlane.f32.xlu0 %v895
      %v959 = vpop.xlane.xlu0 %958
      %960 = vadd.xlane.f32.xlu0 %v897
      %v961 = vpop.xlane.xlu0 %960
      %962 = vadd.xlane.f32.xlu0 %v899
      %v963 = vpop.xlane.xlu0 %962
      %964 = vadd.xlane.f32.xlu0 %v901
      %v965 = vpop.xlane.xlu0 %964
      %966 = vadd.xlane.f32.xlu0 %v903
      %v967 = vpop.xlane.xlu0 %966
      %968 = vadd.xlane.f32.xlu0 %v905
      %v969 = vpop.xlane.xlu0 %968
      %970 = vadd.xlane.f32.xlu0 %v907
      %v971 = vpop.xlane.xlu0 %970
      %972 = vadd.xlane.f32.xlu0 %v909
      %v973 = vpop.xlane.xlu0 %972
      %974 = vadd.xlane.f32.xlu0 %v911
      %v975 = vpop.xlane.xlu0 %974
      %976 = vadd.xlane.f32.xlu0 %v913
      %v977 = vpop.xlane.xlu0 %976
      %978 = vadd.xlane.f32.xlu0 %v915
      %v979 = vpop.xlane.xlu0 %978
      %980 = vadd.xlane.f32.xlu0 %v917
      %v981 = vpop.xlane.xlu0 %980
      %982 = vadd.xlane.f32.xlu0 %v919
      %v983 = vpop.xlane.xlu0 %982
      %984 = vadd.xlane.f32.xlu0 %v921
      %v985 = vpop.xlane.xlu0 %984
      %986 = vadd.xlane.f32.xlu0 %v923
      %v987 = vpop.xlane.xlu0 %986
      %988 = vadd.xlane.f32.xlu0 %v925
      %v989 = vpop.xlane.xlu0 %988
      %990 = vadd.xlane.f32.xlu0 %v927
      %v991 = vpop.xlane.xlu0 %990
      %992 = vadd.xlane.f32.xlu0 %v929
      %v993 = vpop.xlane.xlu0 %992
      %994 = vadd.xlane.f32.xlu0 %v931
      %v995 = vpop.xlane.xlu0 %994
      %996 = vadd.xlane.f32.xlu0 %v933
      %v997 = vpop.xlane.xlu0 %996
      %998 = vadd.xlane.f32.xlu0 %v935
      %v999 = vpop.xlane.xlu0 %998
      %1000 = vadd.xlane.f32.xlu0 %v937
      %v1001 = vpop.xlane.xlu0 %1000
      %1002 = vadd.xlane.f32.xlu0 %v939
      %v1003 = vpop.xlane.xlu0 %1002
      %1004 = vadd.xlane.f32.xlu0 %v941
      %v1005 = vpop.xlane.xlu0 %1004
      %1006 = vadd.xlane.f32.xlu0 %v943
      %v1007 = vpop.xlane.xlu0 %1006
      %1008 = vadd.xlane.f32.xlu0 %v945
      %v1009 = vpop.xlane.xlu0 %1008
      %1010 = vadd.xlane.f32.xlu0 %v947
      %v1011 = vpop.xlane.xlu0 %1010
      %1012 = vadd.xlane.f32.xlu0 %v949
      %v1013 = vpop.xlane.xlu0 %1012
      %v1014 = vlog2.pop %v951
      %v1015 = vmul.f32 %v1014, 0.6931472
      %v1016 = vlog2.pop %v953
      %v1017 = vmul.f32 %v1016, 0.6931472
      %v1018 = vlog2.pop %v955
      %v1019 = vmul.f32 %v1018, 0.6931472
      %v1020 = vlog2.pop %v957
      %v1021 = vmul.f32 %v1020, 0.6931472
      %v1022 = vlog2.pop %v959
      %v1023 = vmul.f32 %v1022, 0.6931472
      %v1024 = vlog2.pop %v961
      %v1025 = vmul.f32 %v1024, 0.6931472
      %v1026 = vlog2.pop %v963
      %v1027 = vmul.f32 %v1026, 0.6931472
      %v1028 = vlog2.pop %v965
      %v1029 = vmul.f32 %v1028, 0.6931472
      %v1030 = vlog2.pop %v967
      %v1031 = vmul.f32 %v1030, 0.6931472
      %v1032 = vlog2.pop %v969
      %v1033 = vmul.f32 %v1032, 0.6931472
      %v1034 = vlog2.pop %v971
      %v1035 = vmul.f32 %v1034, 0.6931472
      %v1036 = vlog2.pop %v973
      %v1037 = vmul.f32 %v1036, 0.6931472
      %v1038 = vlog2.pop %v975
      %v1039 = vmul.f32 %v1038, 0.6931472
      %v1040 = vlog2.pop %v977
      %v1041 = vmul.f32 %v1040, 0.6931472
      %v1042 = vlog2.pop %v979
      %v1043 = vmul.f32 %v1042, 0.6931472
      %v1044 = vlog2.pop %v981
      %v1045 = vmul.f32 %v1044, 0.6931472
      %v1046 = vlog2.pop %v983
      %v1047 = vmul.f32 %v1046, 0.6931472
      %v1048 = vlog2.pop %v985
      %v1049 = vmul.f32 %v1048, 0.6931472
      %v1050 = vlog2.pop %v987
      %v1051 = vmul.f32 %v1050, 0.6931472
      %v1052 = vlog2.pop %v989
      %v1053 = vmul.f32 %v1052, 0.6931472
      %v1054 = vlog2.pop %v991
      %v1055 = vmul.f32 %v1054, 0.6931472
      %v1056 = vlog2.pop %v993
      %v1057 = vmul.f32 %v1056, 0.6931472
      %v1058 = vlog2.pop %v995
      %v1059 = vmul.f32 %v1058, 0.6931472
      %v1060 = vlog2.pop %v997
      %v1061 = vmul.f32 %v1060, 0.6931472
      %v1062 = vlog2.pop %v999
      %v1063 = vmul.f32 %v1062, 0.6931472
      %v1064 = vlog2.pop %v1001
      %v1065 = vmul.f32 %v1064, 0.6931472
      %v1066 = vlog2.pop %v1003
      %v1067 = vmul.f32 %v1066, 0.6931472
      %v1068 = vlog2.pop %v1005
      %v1069 = vmul.f32 %v1068, 0.6931472
      %v1070 = vlog2.pop %v1007
      %v1071 = vmul.f32 %v1070, 0.6931472
      %v1072 = vlog2.pop %v1009
      %v1073 = vmul.f32 %v1072, 0.6931472
      %v1074 = vlog2.pop %v1011
      %v1075 = vmul.f32 %v1074, 0.6931472
      %v1076 = vlog2.pop %v1013
      %v1077 = vmul.f32 %v1076, 0.6931472
      %v1078 = vsub.f32 %v854, %v1015
      %v1079 = vsub.f32 %v855, %v1017
      %v1080 = vsub.f32 %v856, %v1019
      %v1081 = vsub.f32 %v857, %v1021
      %v1082 = vsub.f32 %v858, %v1023
      %v1083 = vsub.f32 %v859, %v1025
      %v1084 = vsub.f32 %v860, %v1027
      %v1085 = vsub.f32 %v861, %v1029
      %v1086 = vsub.f32 %v862, %v1031
      %v1087 = vsub.f32 %v863, %v1033
      %v1088 = vsub.f32 %v864, %v1035
      %v1089 = vsub.f32 %v865, %v1037
      %v1090 = vsub.f32 %v866, %v1039
      %v1091 = vsub.f32 %v867, %v1041
      %v1092 = vsub.f32 %v868, %v1043
      %v1093 = vsub.f32 %v869, %v1045
      %v1094 = vsub.f32 %v870, %v1047
      %v1095 = vsub.f32 %v871, %v1049
      %v1096 = vsub.f32 %v872, %v1051
      %v1097 = vsub.f32 %v873, %v1053
      %v1098 = vsub.f32 %v874, %v1055
      %v1099 = vsub.f32 %v875, %v1057
      %v1100 = vsub.f32 %v876, %v1059
      %v1101 = vsub.f32 %v877, %v1061
      %v1102 = vsub.f32 %v878, %v1063
      %v1103 = vsub.f32 %v879, %v1065
      %v1104 = vsub.f32 %v880, %v1067
      %v1105 = vsub.f32 %v881, %v1069
      %v1106 = vsub.f32 %v882, %v1071
      %v1107 = vsub.f32 %v883, %v1073
      %v1108 = vsub.f32 %v884, %v1075
      %v1109 = vsub.f32 %v885, %v1077
      %vm1110 = vcmask 130048
      %1111 = vst.msk [vmem:[%s226] sm:$0xff] %vm1110, %v1078
      %1112 = vst.msk [vmem:[%s226 + $0x8] sm:$0xff] %vm1110, %v1079
      %1113 = vst.msk [vmem:[%s226 + $0x10] sm:$0xff] %vm1110, %v1080
      %1114 = vst.msk [vmem:[%s226 + $0x18] sm:$0xff] %vm1110, %v1081
      %1115 = vst.msk [vmem:[%s226 + $0x20] sm:$0xff] %vm1110, %v1082
      %1116 = vst.msk [vmem:[%s226 + $0x28] sm:$0xff] %vm1110, %v1083
      %1117 = vst.msk [vmem:[%s226 + $0x30] sm:$0xff] %vm1110, %v1084
      %1118 = vst.msk [vmem:[%s226 + $0x38] sm:$0xff] %vm1110, %v1085
      %1119 = vst.msk [vmem:[%s226 + $0x40] sm:$0xff] %vm1110, %v1086
      %1120 = vst.msk [vmem:[%s226 + $0x48] sm:$0xff] %vm1110, %v1087
      %1121 = vst.msk [vmem:[%s226 + $0x50] sm:$0xff] %vm1110, %v1088
      %1122 = vst.msk [vmem:[%s226 + $0x58] sm:$0xff] %vm1110, %v1089
      %1123 = vst.msk [vmem:[%s226 + $0x60] sm:$0xff] %vm1110, %v1090
      %1124 = vst.msk [vmem:[%s226 + $0x68] sm:$0xff] %vm1110, %v1091
      %1125 = vst.msk [vmem:[%s226 + $0x70] sm:$0xff] %vm1110, %v1092
      %1126 = vst.msk [vmem:[%s226 + $0x78] sm:$0xff] %vm1110, %v1093
      %1127 = vst.msk [vmem:[%s226 + $0x80] sm:$0xff] %vm1110, %v1094
      %1128 = vst.msk [vmem:[%s226 + $0x88] sm:$0xff] %vm1110, %v1095
      %1129 = vst.msk [vmem:[%s226 + $0x90] sm:$0xff] %vm1110, %v1096
      %1130 = vst.msk [vmem:[%s226 + $0x98] sm:$0xff] %vm1110, %v1097
      %1131 = vst.msk [vmem:[%s226 + $0xa0] sm:$0xff] %vm1110, %v1098
      %1132 = vst.msk [vmem:[%s226 + $0xa8] sm:$0xff] %vm1110, %v1099
      %1133 = vst.msk [vmem:[%s226 + $0xb0] sm:$0xff] %vm1110, %v1100
      %1134 = vst.msk [vmem:[%s226 + $0xb8] sm:$0xff] %vm1110, %v1101
      %1135 = vst.msk [vmem:[%s226 + $0xc0] sm:$0xff] %vm1110, %v1102
      %1136 = vst.msk [vmem:[%s226 + $0xc8] sm:$0xff] %vm1110, %v1103
      %1137 = vst.msk [vmem:[%s226 + $0xd0] sm:$0xff] %vm1110, %v1104
      %1138 = vst.msk [vmem:[%s226 + $0xd8] sm:$0xff] %vm1110, %v1105
      %1139 = vst.msk [vmem:[%s226 + $0xe0] sm:$0xff] %vm1110, %v1106
      %1140 = vst.msk [vmem:[%s226 + $0xe8] sm:$0xff] %vm1110, %v1107
      %1141 = vst.msk [vmem:[%s226 + $0xf0] sm:$0xff] %vm1110, %v1108
      %1142 = vst.msk [vmem:[%s226 + $0xf8] sm:$0xff] %vm1110, %v1109
      %s1143 = smul.u32 32, %s16
      %p1144 = scmp.lt.s32.totalorder %s1143, 63
      %s1145 = scalar_select %p1144, %s1143, 63
      %s1146 = smul.addr %s1145, 8
      %s1147 = scalar_lea.vmem %s5, %s1146
      // Predicated region
      $region41: #{net_forward.1} parent=39 // pred_check
        %p1148 = pneg %p144
      $region42: #{net_forward.1} parent=39 // pred_check_branch
        %1150 = sbr.rel (%p1148) target = $region44
      $region43: #{net_forward.1} parent=39 // pred_region
        %s1151 = smul.u32 32, %s16
      $region44: #{net_forward.1} parent=39 // pred_fallthru
        _
    $region40: #{net_forward.1} parent=5 // pred_fallthru
      _
    %p1152 = scmp.le.s32.totalorder 2, %s11
    // Predicated region
    $region45: #{net_forward.1} parent=5 // pred_check
      %p1153 = pneg %p1152
    $region46: #{net_forward.1} parent=5 // pred_check_branch
      %1155 = sbr.rel (%p1153) target = $region48
    $region47: #{net_forward.1} parent=5 // pred_region
      %s1156 = ssub.s32 %s11, 2
      // Predicated region
      $region49: #{net_forward.1} parent=47 // pred_check
        %p1157 = pneg %p150
      $region50: #{net_forward.1} parent=47 // pred_check_branch
        %1159 = sbr.rel (%p1157) target = $region52
      $region51: #{net_forward.1} parent=47 // pred_region
        %s1160 = smul.u32 32, %s17
        %p1161 = scmp.lt.s32.totalorder %s1160, 63
        %s1162 = scalar_select %p1161, %s1160, 63
        %s1163 = smul.addr %s1162, 8
        %s1164 = scalar_lea.vmem %s5, %s1163
      $region52: #{net_forward.1} parent=47 // pred_fallthru
        _
    $region48: #{net_forward.1} parent=5 // pred_fallthru
      _
  $region6: #{net_forward.1} parent=0 // loop_footer
    %s15 = sadd.s32 1, %s11
  $region7: #{net_forward.1} parent=0 // loop_footer_branch
    %10 = sbr.rel target = $region3
  $region8: #{net_forward.1} parent=0 // loop_exit
    _

</llo_original>
